<compile_context>
chip_gen: v7x
topology: tpu7x:2x2x1
jax: 0.10.0
libtpu: 0.0.40
codegen_flags: <defaults>
</compile_context>

<pallas_src>
import functools
import math

import jax
import jax.numpy as jnp
from jax.experimental import pallas as pl
from jax.experimental.pallas import tpu as pltpu


def _round_up(x: int, m: int) -> int:
    return ((x + m - 1) // m) * m


def _make_mlp_kernel(num_layers: int):
    """Fused MLP kernel body: (Linear -> ReLU) x (L-1) -> Linear on one row tile."""

    def kernel(*refs):
        x_ref = refs[0]
        out_ref = refs[-1]
        param_refs = refs[1:-1]  # w0, b0, w1, b1, ...

        compute_dtype = x_ref.dtype
        h = x_ref[...]  # (TILE_M, in_pad), stays in compute dtype (f32 or bf16)
        for i in range(num_layers):
            w = param_refs[2 * i][...]                       # (in_pad, out_pad)
            b = param_refs[2 * i + 1][...].astype(jnp.float32)  # (1, out_pad)
            # MXU matmul with f32 accumulation.
            h = jnp.dot(h, w, preferred_element_type=jnp.float32) + b
            if i < num_layers - 1:
                h = jnp.maximum(h, 0.0)
                # Keep next matmul's LHS in the compute dtype (bf16 path halves
                # vreg pressure / HBM traffic; no-op for f32).
                h = h.astype(compute_dtype)
        out_ref[...] = h.astype(out_ref.dtype)

    return kernel


def init_mlp_params(key, input_dim, hidden_dim, output_dim, num_layers,
                    dtype=jnp.float32):
    """Deterministic parameter init matching the PyTorch module's layer shapes.

    Weights stored as (in, out) = transpose of nn.Linear's (out, in); bias as (out,).
    """
    h = [hidden_dim] * (num_layers - 1)
    in_dims = [input_dim] + h
    out_dims = h + [output_dim]
    params = []
    for n, k in zip(in_dims, out_dims):
        key, kw, kb = jax.random.split(key, 3)
        bound = 1.0 / jnp.sqrt(jnp.float32(n))
        w = jax.random.uniform(kw, (n, k), dtype, -bound, bound)  # (in, out)
        b = jax.random.uniform(kb, (k,), dtype, -bound, bound)    # (out,)
        params.append((w, b))
    return params


@functools.partial(jax.jit, static_argnames=("num_layers",))
def mlp_pallas(x, params_flat, num_layers):
    """x: [..., input_dim]; params_flat: [w0, b0, w1, b1, ...] with w_i: (in, out)."""
    *lead, in_dim = x.shape
    n_rows = math.prod(lead) if lead else 1
    out_dim = params_flat[-1].shape[-1]

    # ---- lane-dense feature padding (multiples of 128) -----------------------
    feat_dims = [params_flat[2 * i].shape[0] for i in range(num_layers)] + [out_dim]
    pdims = [_round_up(d, 128) for d in feat_dims]

    padded_params = []
    for i in range(num_layers):
        w = params_flat[2 * i]
        b = params_flat[2 * i + 1].reshape(1, -1)
        pin, pout = pdims[i], pdims[i + 1]
        w = jnp.pad(w, ((0, pin - w.shape[0]), (0, pout - w.shape[1])))
        b = jnp.pad(b, ((0, 0), (0, pout - b.shape[1])))
        padded_params += [w, b]

    # ---- row tiling -----------------------------------------------------------
    # >=512-row tiles when the problem is big enough (hits HBM roofline); for
    # tiny inputs just round rows up to the sublane granule.
    tile_m = 512 if n_rows >= 512 else _round_up(max(n_rows, 1), 8)
    n_pad = _round_up(n_rows, tile_m)
    grid = (n_pad // tile_m,)

    x2d = x.reshape(n_rows, in_dim)
    x2d = jnp.pad(x2d, ((0, n_pad - n_rows), (0, pdims[0] - in_dim)))

    # ---- specs ----------------------------------------------------------------
    in_specs = [pl.BlockSpec((tile_m, pdims[0]), lambda i: (i, 0))]
    for li in range(num_layers):
        in_specs.append(pl.BlockSpec((pdims[li], pdims[li + 1]), lambda i: (0, 0)))
        in_specs.append(pl.BlockSpec((1, pdims[li + 1]), lambda i: (0, 0)))
    out_spec = pl.BlockSpec((tile_m, pdims[-1]), lambda i: (i, 0))

    # ---- cost estimate (advisory) --------------------------------------------
    itemsize = jnp.dtype(x.dtype).itemsize
    flops = 2 * n_pad * sum(pdims[i] * pdims[i + 1] for i in range(num_layers))
    param_bytes = sum(int(p.size) * jnp.dtype(p.dtype).itemsize for p in padded_params)
    bytes_accessed = (n_pad * pdims[0] + n_pad * pdims[-1]) * itemsize + param_bytes
    cost = pl.CostEstimate(flops=flops, transcendentals=0,
                           bytes_accessed=bytes_accessed)

    kernel = _make_mlp_kernel(num_layers)

    out2d = pl.pallas_call(
        kernel,
        out_shape=jax.ShapeDtypeStruct((n_pad, pdims[-1]), x.dtype),
        grid=grid,
        in_specs=in_specs,
        out_specs=out_spec,
        compiler_params=pltpu.CompilerParams(
            dimension_semantics=("parallel",),
            vmem_limit_bytes=32 * 1024 * 1024,
        ),
        cost_estimate=cost,
    )(x2d, *padded_params)

    out2d = out2d[:n_rows, :out_dim]
    return out2d.reshape(*lead, out_dim)


def mlp_reference(x, params_flat, num_layers):
    h = x
    for i in range(num_layers):
        w = params_flat[2 * i]
        b = params_flat[2 * i + 1]
        h = h @ w + b.reshape(-1)
        if i < num_layers - 1:
            h = jnp.maximum(h, 0.0)
    return h


if __name__ == "__main__":
    input_dim, hidden_dim, output_dim, num_layers = 16, 32, 8, 3
    key = jax.random.PRNGKey(0)
    kx, kx2, kp = jax.random.split(key, 3)

    params = init_mlp_params(kp, input_dim, hidden_dim, output_dim, num_layers)
    params_flat = [p for wb in params for p in wb]

    # --- f32 correctness check (small input, single-tile path) ---------------
    x = jax.random.normal(kx, (2, 8, input_dim), dtype=jnp.float32)
    out = jax.block_until_ready(mlp_pallas(x, params_flat, num_layers))
    ref = mlp_reference(x, params_flat, num_layers)
    assert out.shape == (2, 8, output_dim), out.shape
    assert jnp.allclose(out, ref, atol=1e-5, rtol=1e-5), "f32 mismatch vs reference"

    # --- bf16 performance path (multi-tile grid, row padding, lane-dense) ----
    x_big = jax.random.normal(kx2, (1031, input_dim), dtype=jnp.float32)
    x_bf = x_big.astype(jnp.bfloat16)
    params_bf = [p.astype(jnp.bfloat16) for p in params_flat]
    out_bf = jax.block_until_ready(mlp_pallas(x_bf, params_bf, num_layers))
    ref_bf = mlp_reference(x_bf.astype(jnp.float32),
                           [p.astype(jnp.float32) for p in params_bf], num_layers)
    assert out_bf.shape == (1031, output_dim), out_bf.shape
    assert jnp.allclose(out_bf.astype(jnp.float32), ref_bf, atol=5e-2, rtol=5e-2), \
        "bf16 mismatch vs reference"

    print("KERNEL_OK")
</pallas_src>

<mosaic_0001>
module attributes {stable_mosaic.version = 11 : i64} {
  func.func @kernel(%arg0: i32, %arg1: memref<16x128xf32, #tpu.memory_space<vmem>>, %arg2: memref<128x128xf32, #tpu.memory_space<vmem>>, %arg3: memref<1x128xf32, #tpu.memory_space<vmem>>, %arg4: memref<128x128xf32, #tpu.memory_space<vmem>>, %arg5: memref<1x128xf32, #tpu.memory_space<vmem>>, %arg6: memref<128x128xf32, #tpu.memory_space<vmem>>, %arg7: memref<1x128xf32, #tpu.memory_space<vmem>>, %arg8: memref<16x128xf32, #tpu.memory_space<vmem>>) attributes {dimension_semantics = [#tpu.dimension_semantics<parallel>], iteration_bounds = array<i64: 1>, scalar_prefetch = 0 : i64, scratch_operands = 0 : i64, tpu.core_type = #tpu.core_type<tc>, window_params = [{transform_indices = @transform_0, window_bounds = array<i64: 16, 128>}, {pipeline_mode = #tpu.pipeline_mode<synchronous>, transform_indices = @transform_1, window_bounds = array<i64: 128, 128>}, {pipeline_mode = #tpu.pipeline_mode<synchronous>, transform_indices = @transform_2, window_bounds = array<i64: 1, 128>}, {pipeline_mode = #tpu.pipeline_mode<synchronous>, transform_indices = @transform_3, window_bounds = array<i64: 128, 128>}, {pipeline_mode = #tpu.pipeline_mode<synchronous>, transform_indices = @transform_4, window_bounds = array<i64: 1, 128>}, {pipeline_mode = #tpu.pipeline_mode<synchronous>, transform_indices = @transform_5, window_bounds = array<i64: 128, 128>}, {pipeline_mode = #tpu.pipeline_mode<synchronous>, transform_indices = @transform_6, window_bounds = array<i64: 1, 128>}, {transform_indices = @transform_7, window_bounds = array<i64: 16, 128>}]} {
    %c0 = arith.constant 0 : index
    %c0_0 = arith.constant 0 : index
    %0 = vector.load %arg1[%c0, %c0_0] : memref<16x128xf32, #tpu.memory_space<vmem>>, vector<16x128xf32>
    %c0_1 = arith.constant 0 : index
    %c0_2 = arith.constant 0 : index
    %1 = vector.load %arg2[%c0_1, %c0_2] : memref<128x128xf32, #tpu.memory_space<vmem>>, vector<128x128xf32>
    %c0_3 = arith.constant 0 : index
    %c0_4 = arith.constant 0 : index
    %2 = vector.load %arg3[%c0_3, %c0_4] : memref<1x128xf32, #tpu.memory_space<vmem>>, vector<1x128xf32>
    %cst = arith.constant dense<0.000000e+00> : vector<16x128xf32>
    %3 = tpu.matmul %0, %1, %cst {dimension_numbers = #tpu.dot_dimension_numbers<[1], [0], [0], [1], [0, 0, 1, 1], [], []>} : vector<16x128xf32>, vector<128x128xf32>, vector<16x128xf32> -> vector<16x128xf32>
    %4 = vector.broadcast %2 : vector<1x128xf32> to vector<16x128xf32>
    %5 = arith.addf %3, %4 : vector<16x128xf32>
    %cst_5 = arith.constant 0.000000e+00 : f32
    %6 = vector.broadcast %cst_5 : f32 to vector<16x128xf32>
    %7 = arith.maximumf %5, %6 : vector<16x128xf32>
    %c0_6 = arith.constant 0 : index
    %c0_7 = arith.constant 0 : index
    %8 = vector.load %arg4[%c0_6, %c0_7] : memref<128x128xf32, #tpu.memory_space<vmem>>, vector<128x128xf32>
    %c0_8 = arith.constant 0 : index
    %c0_9 = arith.constant 0 : index
    %9 = vector.load %arg5[%c0_8, %c0_9] : memref<1x128xf32, #tpu.memory_space<vmem>>, vector<1x128xf32>
    %cst_10 = arith.constant dense<0.000000e+00> : vector<16x128xf32>
    %10 = tpu.matmul %7, %8, %cst_10 {dimension_numbers = #tpu.dot_dimension_numbers<[1], [0], [0], [1], [0, 0, 1, 1], [], []>} : vector<16x128xf32>, vector<128x128xf32>, vector<16x128xf32> -> vector<16x128xf32>
    %11 = vector.broadcast %9 : vector<1x128xf32> to vector<16x128xf32>
    %12 = arith.addf %10, %11 : vector<16x128xf32>
    %cst_11 = arith.constant 0.000000e+00 : f32
    %13 = vector.broadcast %cst_11 : f32 to vector<16x128xf32>
    %14 = arith.maximumf %12, %13 : vector<16x128xf32>
    %c0_12 = arith.constant 0 : index
    %c0_13 = arith.constant 0 : index
    %15 = vector.load %arg6[%c0_12, %c0_13] : memref<128x128xf32, #tpu.memory_space<vmem>>, vector<128x128xf32>
    %c0_14 = arith.constant 0 : index
    %c0_15 = arith.constant 0 : index
    %16 = vector.load %arg7[%c0_14, %c0_15] : memref<1x128xf32, #tpu.memory_space<vmem>>, vector<1x128xf32>
    %cst_16 = arith.constant dense<0.000000e+00> : vector<16x128xf32>
    %17 = tpu.matmul %14, %15, %cst_16 {dimension_numbers = #tpu.dot_dimension_numbers<[1], [0], [0], [1], [0, 0, 1, 1], [], []>} : vector<16x128xf32>, vector<128x128xf32>, vector<16x128xf32> -> vector<16x128xf32>
    %18 = vector.broadcast %16 : vector<1x128xf32> to vector<16x128xf32>
    %19 = arith.addf %17, %18 : vector<16x128xf32>
    %c0_17 = arith.constant 0 : index
    %c0_18 = arith.constant 0 : index
    %20 = vector.load %arg8[%c0_17, %c0_18] : memref<16x128xf32, #tpu.memory_space<vmem>>, vector<16x128xf32>
    tpu.vector_store %arg8[%c0_17, %c0_18], %19 {strides = array<i32>} : memref<16x128xf32, #tpu.memory_space<vmem>>, vector<16x128xf32>,
    return
  }
  func.func @transform_0(%arg0: i32) -> (i32, i32) {
    %c0_i32 = arith.constant 0 : i32
    %c0_i32_0 = arith.constant 0 : i32
    return %arg0, %c0_i32 : i32, i32
  }
  func.func @transform_1(%arg0: i32) -> (i32, i32) {
    %c0_i32 = arith.constant 0 : i32
    %c0_i32_0 = arith.constant 0 : i32
    %c0_i32_1 = arith.constant 0 : i32
    return %c0_i32, %c0_i32_0 : i32, i32
  }
  func.func @transform_2(%arg0: i32) -> (i32, i32) {
    %c0_i32 = arith.constant 0 : i32
    %c0_i32_0 = arith.constant 0 : i32
    %c0_i32_1 = arith.constant 0 : i32
    return %c0_i32, %c0_i32_0 : i32, i32
  }
  func.func @transform_3(%arg0: i32) -> (i32, i32) {
    %c0_i32 = arith.constant 0 : i32
    %c0_i32_0 = arith.constant 0 : i32
    %c0_i32_1 = arith.constant 0 : i32
    return %c0_i32, %c0_i32_0 : i32, i32
  }
  func.func @transform_4(%arg0: i32) -> (i32, i32) {
    %c0_i32 = arith.constant 0 : i32
    %c0_i32_0 = arith.constant 0 : i32
    %c0_i32_1 = arith.constant 0 : i32
    return %c0_i32, %c0_i32_0 : i32, i32
  }
  func.func @transform_5(%arg0: i32) -> (i32, i32) {
    %c0_i32 = arith.constant 0 : i32
    %c0_i32_0 = arith.constant 0 : i32
    %c0_i32_1 = arith.constant 0 : i32
    return %c0_i32, %c0_i32_0 : i32, i32
  }
  func.func @transform_6(%arg0: i32) -> (i32, i32) {
    %c0_i32 = arith.constant 0 : i32
    %c0_i32_0 = arith.constant 0 : i32
    %c0_i32_1 = arith.constant 0 : i32
    return %c0_i32, %c0_i32_0 : i32, i32
  }
  func.func @transform_7(%arg0: i32) -> (i32, i32) {
    %c0_i32 = arith.constant 0 : i32
    %c0_i32_0 = arith.constant 0 : i32
    return %arg0, %c0_i32 : i32, i32
  }
}

</mosaic_0001>

<llo_original>
// kernel: mlp_pallas.1
$region0: #{mlp_pallas.1}
  #allocation0 [shape = 'u32[]', space=smem, size = 0x4, offset = 0x4, fixed_abs, tag = 'smem constant byte address 0x4 - core index']
  #allocation1 [shape = 'u32[144,128]{1,0:T(1,128)}', space=vmem, size = 0x12000, scoped, tag = 'internal scratch']
  %s0 = inlined_call_operand.vmem [shape: f32[16,128], index: 0, kind: input, shape index: {}]
  %s1 = inlined_call_operand.vmem [shape: f32[128,128], index: 1, kind: input, shape index: {}]
  %s2 = inlined_call_operand.vmem [shape: f32[1,128], index: 2, kind: input, shape index: {}]
  %s3 = inlined_call_operand.vmem [shape: f32[128,128], index: 3, kind: input, shape index: {}]
  %s4 = inlined_call_operand.vmem [shape: f32[1,128], index: 4, kind: input, shape index: {}]
  %s5 = inlined_call_operand.vmem [shape: f32[128,128], index: 5, kind: input, shape index: {}]
  %s6 = inlined_call_operand.vmem [shape: f32[1,128], index: 6, kind: input, shape index: {}]
  %s7 = inlined_call_operand.vmem [shape: f32[16,128], index: 7, kind: output, shape index: {}]
  %s8 = sld [smem:[#allocation0]]
  $region38: #{mlp_pallas.1} parent=0
    _
  %s10 = ssub.s32 1, %s8
  %s11 = scalar_select 0, %s10, %s8
  // Predicated region
  $region2: #{mlp_pallas.1} parent=0 // pred_check
    _
  $region3: #{mlp_pallas.1} parent=0 // pred_check_branch
    %13 = sbr.rel (0) target = $region5
  $region4: #{mlp_pallas.1} parent=0 // pred_region
    _
  $region5: #{mlp_pallas.1} parent=0 // pred_fallthru
    _
  // Predicated region
  $region6: #{mlp_pallas.1} parent=0 // pred_check
    _
  $region7: #{mlp_pallas.1} parent=0 // pred_check_branch
    %15 = sbr.rel (0) target = $region9
  $region8: #{mlp_pallas.1} parent=0 // pred_region
    _
  $region9: #{mlp_pallas.1} parent=0 // pred_fallthru
    _
  // Predicated region
  $region10: #{mlp_pallas.1} parent=0 // pred_check
    _
  $region11: #{mlp_pallas.1} parent=0 // pred_check_branch
    %17 = sbr.rel (0) target = $region13
  $region12: #{mlp_pallas.1} parent=0 // pred_region
    _
  $region13: #{mlp_pallas.1} parent=0 // pred_fallthru
    _
  // Predicated region
  $region14: #{mlp_pallas.1} parent=0 // pred_check
    _
  $region15: #{mlp_pallas.1} parent=0 // pred_check_branch
    %19 = sbr.rel (0) target = $region17
  $region16: #{mlp_pallas.1} parent=0 // pred_region
    _
  $region17: #{mlp_pallas.1} parent=0 // pred_fallthru
    _
  // Predicated region
  $region18: #{mlp_pallas.1} parent=0 // pred_check
    _
  $region19: #{mlp_pallas.1} parent=0 // pred_check_branch
    %21 = sbr.rel (0) target = $region21
  $region20: #{mlp_pallas.1} parent=0 // pred_region
    _
  $region21: #{mlp_pallas.1} parent=0 // pred_fallthru
    _
  // Predicated region
  $region22: #{mlp_pallas.1} parent=0 // pred_check
    _
  $region23: #{mlp_pallas.1} parent=0 // pred_check_branch
    %23 = sbr.rel (0) target = $region25
  $region24: #{mlp_pallas.1} parent=0 // pred_region
    _
  $region25: #{mlp_pallas.1} parent=0 // pred_fallthru
    _
  // Predicated region
  $region26: #{mlp_pallas.1} parent=0 // pred_check
    _
  $region27: #{mlp_pallas.1} parent=0 // pred_check_branch
    %25 = sbr.rel (0) target = $region29
  $region28: #{mlp_pallas.1} parent=0 // pred_region
    _
  $region29: #{mlp_pallas.1} parent=0 // pred_fallthru
    _
  %v26 = vld [vmem:[%s0] sm:$0xff]
  %v27 = vld [vmem:[%s0 + $0x8] sm:$0xff]
  %v28 = vld [vmem:[%s1] sm:$0xff]
  %v29 = vld [vmem:[%s1 + $0x8] sm:$0xff]
  %v30 = vld [vmem:[%s1 + $0x10] sm:$0xff]
  %v31 = vld [vmem:[%s1 + $0x18] sm:$0xff]
  %v32 = vld [vmem:[%s1 + $0x20] sm:$0xff]
  %v33 = vld [vmem:[%s1 + $0x28] sm:$0xff]
  %v34 = vld [vmem:[%s1 + $0x30] sm:$0xff]
  %v35 = vld [vmem:[%s1 + $0x38] sm:$0xff]
  %v36 = vld [vmem:[%s1 + $0x40] sm:$0xff]
  %v37 = vld [vmem:[%s1 + $0x48] sm:$0xff]
  %v38 = vld [vmem:[%s1 + $0x50] sm:$0xff]
  %v39 = vld [vmem:[%s1 + $0x58] sm:$0xff]
  %v40 = vld [vmem:[%s1 + $0x60] sm:$0xff]
  %v41 = vld [vmem:[%s1 + $0x68] sm:$0xff]
  %v42 = vld [vmem:[%s1 + $0x70] sm:$0xff]
  %v43 = vld [vmem:[%s1 + $0x78] sm:$0xff]
  %v44 = vld [vmem:[%s2] sm:$0x1]
  %v46 = vlaneseq
  %v47 = vshrl.u32 %v46, 7
  %v48 = vsub.s32 0, %v47
  %v49 = vrot.slane %v44, %v48
  %51 = vmatprep.subr.mxu0 0.0
  %52 = vmatpush1.msra.mxu0 %v28
  %53 = vmatprep.subr.mxu0 0.0
  %54 = vmatpush1.msra.mxu0 %v29
  %55 = vmatprep.subr.mxu0 0.0
  %56 = vmatpush1.msra.mxu0 %v30
  %57 = vmatprep.subr.mxu0 0.0
  %58 = vmatpush1.msra.mxu0 %v31
  %59 = vmatprep.subr.mxu0 0.0
  %60 = vmatpush1.msra.mxu0 %v32
  %61 = vmatprep.subr.mxu0 0.0
  %62 = vmatpush1.msra.mxu0 %v33
  %63 = vmatprep.subr.mxu0 0.0
  %64 = vmatpush1.msra.mxu0 %v34
  %65 = vmatprep.subr.mxu0 0.0
  %66 = vmatpush1.msra.mxu0 %v35
  %67 = vmatprep.subr.mxu0 0.0
  %68 = vmatpush1.msra.mxu0 %v36
  %69 = vmatprep.subr.mxu0 0.0
  %70 = vmatpush1.msra.mxu0 %v37
  %71 = vmatprep.subr.mxu0 0.0
  %72 = vmatpush1.msra.mxu0 %v38
  %73 = vmatprep.subr.mxu0 0.0
  %74 = vmatpush1.msra.mxu0 %v39
  %75 = vmatprep.subr.mxu0 0.0
  %76 = vmatpush1.msra.mxu0 %v40
  %77 = vmatprep.subr.mxu0 0.0
  %78 = vmatpush1.msra.mxu0 %v41
  %79 = vmatprep.subr.mxu0 0.0
  %80 = vmatpush1.msra.mxu0 %v42
  %81 = vmatprep.subr.mxu0 0.0
  %82 = vmatpush1.msra.mxu0 %v43
  %83 = vmatprep.subr.mxu0 0.0
  %84 = vmatpush1.msra.mxu0 0.0
  %85 = vmatprep.subr.mxu0 0.0
  %86 = vmatpush1.msra.mxu0 0.0
  %87 = vmatprep.subr.mxu0 0.0
  %88 = vmatpush1.msra.mxu0 0.0
  %89 = vmatprep.subr.mxu0 0.0
  %90 = vmatpush1.msra.mxu0 0.0
  %91 = vmatprep.subr.mxu0 0.0
  %92 = vmatpush1.msra.mxu0 0.0
  %93 = vmatprep.subr.mxu0 0.0
  %94 = vmatpush1.msra.mxu0 0.0
  %95 = vmatprep.subr.mxu0 0.0
  %96 = vmatpush1.msra.mxu0 0.0
  %97 = vmatprep.subr.mxu0 0.0
  %98 = vmatpush1.msra.mxu0 0.0
  %99 = vmatprep.subr.mxu0 0.0
  %100 = vmatpush1.msra.mxu0 0.0
  %101 = vmatprep.subr.mxu0 0.0
  %102 = vmatpush1.msra.mxu0 0.0
  %103 = vmatprep.subr.mxu0 0.0
  %104 = vmatpush1.msra.mxu0 0.0
  %105 = vmatprep.subr.mxu0 0.0
  %106 = vmatpush1.msra.mxu0 0.0
  %107 = vmatprep.subr.mxu0 0.0
  %108 = vmatpush1.msra.mxu0 0.0
  %109 = vmatprep.subr.mxu0 0.0
  %110 = vmatpush1.msra.mxu0 0.0
  %111 = vmatprep.subr.mxu0 0.0
  %112 = vmatpush1.msra.mxu0 0.0
  %113 = vmatprep.subr.mxu0 0.0
  %114 = vmatpush1.msra.mxu0 0.0
  %115 = vmatprep.mubr.f32.mxu0 0.0
  %116 = vmatmul.mubr.f32.gmra.mrb[0].mxu0 %v26
  %v117 = vpop.f32.mrb[0].mxu0
  %v118 = vadd.f32 %v49, %v117
  %v119 = vpop.f32.mrb[0].mxu0
  %120 = vmatprep.mubr.f32.mxu0 0.0
  %121 = vmatmul.mubr.f32.gmra.mrb[0].mxu0 %v27
  %v122 = vpop.f32.mrb[0].mxu0
  %v123 = vadd.f32 %v49, %v122
  %v124 = vpop.f32.mrb[0].mxu0
  %125 = vdwg.mxu0
  %v126 = vmax.f32 %v118, 0.0
  %v127 = vmax.f32 %v123, 0.0
  %v128 = vld [vmem:[%s3] sm:$0xff]
  %v129 = vld [vmem:[%s3 + $0x8] sm:$0xff]
  %v130 = vld [vmem:[%s3 + $0x10] sm:$0xff]
  %v131 = vld [vmem:[%s3 + $0x18] sm:$0xff]
  %v132 = vld [vmem:[%s3 + $0x20] sm:$0xff]
  %v133 = vld [vmem:[%s3 + $0x28] sm:$0xff]
  %v134 = vld [vmem:[%s3 + $0x30] sm:$0xff]
  %v135 = vld [vmem:[%s3 + $0x38] sm:$0xff]
  %v136 = vld [vmem:[%s3 + $0x40] sm:$0xff]
  %v137 = vld [vmem:[%s3 + $0x48] sm:$0xff]
  %v138 = vld [vmem:[%s3 + $0x50] sm:$0xff]
  %v139 = vld [vmem:[%s3 + $0x58] sm:$0xff]
  %v140 = vld [vmem:[%s3 + $0x60] sm:$0xff]
  %v141 = vld [vmem:[%s3 + $0x68] sm:$0xff]
  %v142 = vld [vmem:[%s3 + $0x70] sm:$0xff]
  %v143 = vld [vmem:[%s3 + $0x78] sm:$0xff]
  %v144 = vld [vmem:[%s4] sm:$0x1]
  %v146 = vlaneseq
  %v147 = vshrl.u32 %v146, 7
  %v148 = vsub.s32 0, %v147
  %v149 = vrot.slane %v144, %v148
  %151 = vmatprep.subr.mxu0 0.0
  %152 = vmatpush1.msra.mxu0 %v128
  %153 = vmatprep.subr.mxu0 0.0
  %154 = vmatpush1.msra.mxu0 %v129
  %155 = vmatprep.subr.mxu0 0.0
  %156 = vmatpush1.msra.mxu0 %v130
  %157 = vmatprep.subr.mxu0 0.0
  %158 = vmatpush1.msra.mxu0 %v131
  %159 = vmatprep.subr.mxu0 0.0
  %160 = vmatpush1.msra.mxu0 %v132
  %161 = vmatprep.subr.mxu0 0.0
  %162 = vmatpush1.msra.mxu0 %v133
  %163 = vmatprep.subr.mxu0 0.0
  %164 = vmatpush1.msra.mxu0 %v134
  %165 = vmatprep.subr.mxu0 0.0
  %166 = vmatpush1.msra.mxu0 %v135
  %167 = vmatprep.subr.mxu0 0.0
  %168 = vmatpush1.msra.mxu0 %v136
  %169 = vmatprep.subr.mxu0 0.0
  %170 = vmatpush1.msra.mxu0 %v137
  %171 = vmatprep.subr.mxu0 0.0
  %172 = vmatpush1.msra.mxu0 %v138
  %173 = vmatprep.subr.mxu0 0.0
  %174 = vmatpush1.msra.mxu0 %v139
  %175 = vmatprep.subr.mxu0 0.0
  %176 = vmatpush1.msra.mxu0 %v140
  %177 = vmatprep.subr.mxu0 0.0
  %178 = vmatpush1.msra.mxu0 %v141
  %179 = vmatprep.subr.mxu0 0.0
  %180 = vmatpush1.msra.mxu0 %v142
  %181 = vmatprep.subr.mxu0 0.0
  %182 = vmatpush1.msra.mxu0 %v143
  %183 = vmatprep.subr.mxu0 0.0
  %184 = vmatpush1.msra.mxu0 0.0
  %185 = vmatprep.subr.mxu0 0.0
  %186 = vmatpush1.msra.mxu0 0.0
  %187 = vmatprep.subr.mxu0 0.0
  %188 = vmatpush1.msra.mxu0 0.0
  %189 = vmatprep.subr.mxu0 0.0
  %190 = vmatpush1.msra.mxu0 0.0
  %191 = vmatprep.subr.mxu0 0.0
  %192 = vmatpush1.msra.mxu0 0.0
  %193 = vmatprep.subr.mxu0 0.0
  %194 = vmatpush1.msra.mxu0 0.0
  %195 = vmatprep.subr.mxu0 0.0
  %196 = vmatpush1.msra.mxu0 0.0
  %197 = vmatprep.subr.mxu0 0.0
  %198 = vmatpush1.msra.mxu0 0.0
  %199 = vmatprep.subr.mxu0 0.0
  %200 = vmatpush1.msra.mxu0 0.0
  %201 = vmatprep.subr.mxu0 0.0
  %202 = vmatpush1.msra.mxu0 0.0
  %203 = vmatprep.subr.mxu0 0.0
  %204 = vmatpush1.msra.mxu0 0.0
  %205 = vmatprep.subr.mxu0 0.0
  %206 = vmatpush1.msra.mxu0 0.0
  %207 = vmatprep.subr.mxu0 0.0
  %208 = vmatpush1.msra.mxu0 0.0
  %209 = vmatprep.subr.mxu0 0.0
  %210 = vmatpush1.msra.mxu0 0.0
  %211 = vmatprep.subr.mxu0 0.0
  %212 = vmatpush1.msra.mxu0 0.0
  %213 = vmatprep.subr.mxu0 0.0
  %214 = vmatpush1.msra.mxu0 0.0
  %215 = vmatprep.mubr.f32.mxu0 0.0
  %216 = vmatmul.mubr.f32.gmra.mrb[0].mxu0 %v126
  %v217 = vpop.f32.mrb[0].mxu0
  %v218 = vadd.f32 %v149, %v217
  %v219 = vpop.f32.mrb[0].mxu0
  %220 = vmatprep.mubr.f32.mxu0 0.0
  %221 = vmatmul.mubr.f32.gmra.mrb[0].mxu0 %v127
  %v222 = vpop.f32.mrb[0].mxu0
  %v223 = vadd.f32 %v149, %v222
  %v224 = vpop.f32.mrb[0].mxu0
  %225 = vdwg.mxu0
  %v226 = vmax.f32 %v218, 0.0
  %v227 = vmax.f32 %v223, 0.0
  %v228 = vld [vmem:[%s5] sm:$0xff]
  %v229 = vld [vmem:[%s5 + $0x8] sm:$0xff]
  %v230 = vld [vmem:[%s5 + $0x10] sm:$0xff]
  %v231 = vld [vmem:[%s5 + $0x18] sm:$0xff]
  %v232 = vld [vmem:[%s5 + $0x20] sm:$0xff]
  %v233 = vld [vmem:[%s5 + $0x28] sm:$0xff]
  %v234 = vld [vmem:[%s5 + $0x30] sm:$0xff]
  %v235 = vld [vmem:[%s5 + $0x38] sm:$0xff]
  %v236 = vld [vmem:[%s5 + $0x40] sm:$0xff]
  %v237 = vld [vmem:[%s5 + $0x48] sm:$0xff]
  %v238 = vld [vmem:[%s5 + $0x50] sm:$0xff]
  %v239 = vld [vmem:[%s5 + $0x58] sm:$0xff]
  %v240 = vld [vmem:[%s5 + $0x60] sm:$0xff]
  %v241 = vld [vmem:[%s5 + $0x68] sm:$0xff]
  %v242 = vld [vmem:[%s5 + $0x70] sm:$0xff]
  %v243 = vld [vmem:[%s5 + $0x78] sm:$0xff]
  %v244 = vld [vmem:[%s6] sm:$0x1]
  %v246 = vlaneseq
  %v247 = vshrl.u32 %v246, 7
  %v248 = vsub.s32 0, %v247
  %v249 = vrot.slane %v244, %v248
  %251 = vmatprep.subr.mxu0 0.0
  %252 = vmatpush1.msra.mxu0 %v228
  %253 = vmatprep.subr.mxu0 0.0
  %254 = vmatpush1.msra.mxu0 %v229
  %255 = vmatprep.subr.mxu0 0.0
  %256 = vmatpush1.msra.mxu0 %v230
  %257 = vmatprep.subr.mxu0 0.0
  %258 = vmatpush1.msra.mxu0 %v231
  %259 = vmatprep.subr.mxu0 0.0
  %260 = vmatpush1.msra.mxu0 %v232
  %261 = vmatprep.subr.mxu0 0.0
  %262 = vmatpush1.msra.mxu0 %v233
  %263 = vmatprep.subr.mxu0 0.0
  %264 = vmatpush1.msra.mxu0 %v234
  %265 = vmatprep.subr.mxu0 0.0
  %266 = vmatpush1.msra.mxu0 %v235
  %267 = vmatprep.subr.mxu0 0.0
  %268 = vmatpush1.msra.mxu0 %v236
  %269 = vmatprep.subr.mxu0 0.0
  %270 = vmatpush1.msra.mxu0 %v237
  %271 = vmatprep.subr.mxu0 0.0
  %272 = vmatpush1.msra.mxu0 %v238
  %273 = vmatprep.subr.mxu0 0.0
  %274 = vmatpush1.msra.mxu0 %v239
  %275 = vmatprep.subr.mxu0 0.0
  %276 = vmatpush1.msra.mxu0 %v240
  %277 = vmatprep.subr.mxu0 0.0
  %278 = vmatpush1.msra.mxu0 %v241
  %279 = vmatprep.subr.mxu0 0.0
  %280 = vmatpush1.msra.mxu0 %v242
  %281 = vmatprep.subr.mxu0 0.0
  %282 = vmatpush1.msra.mxu0 %v243
  %283 = vmatprep.subr.mxu0 0.0
  %284 = vmatpush1.msra.mxu0 0.0
  %285 = vmatprep.subr.mxu0 0.0
  %286 = vmatpush1.msra.mxu0 0.0
  %287 = vmatprep.subr.mxu0 0.0
  %288 = vmatpush1.msra.mxu0 0.0
  %289 = vmatprep.subr.mxu0 0.0
  %290 = vmatpush1.msra.mxu0 0.0
  %291 = vmatprep.subr.mxu0 0.0
  %292 = vmatpush1.msra.mxu0 0.0
  %293 = vmatprep.subr.mxu0 0.0
  %294 = vmatpush1.msra.mxu0 0.0
  %295 = vmatprep.subr.mxu0 0.0
  %296 = vmatpush1.msra.mxu0 0.0
  %297 = vmatprep.subr.mxu0 0.0
  %298 = vmatpush1.msra.mxu0 0.0
  %299 = vmatprep.subr.mxu0 0.0
  %300 = vmatpush1.msra.mxu0 0.0
  %301 = vmatprep.subr.mxu0 0.0
  %302 = vmatpush1.msra.mxu0 0.0
  %303 = vmatprep.subr.mxu0 0.0
  %304 = vmatpush1.msra.mxu0 0.0
  %305 = vmatprep.subr.mxu0 0.0
  %306 = vmatpush1.msra.mxu0 0.0
  %307 = vmatprep.subr.mxu0 0.0
  %308 = vmatpush1.msra.mxu0 0.0
  %309 = vmatprep.subr.mxu0 0.0
  %310 = vmatpush1.msra.mxu0 0.0
  %311 = vmatprep.subr.mxu0 0.0
  %312 = vmatpush1.msra.mxu0 0.0
  %313 = vmatprep.subr.mxu0 0.0
  %314 = vmatpush1.msra.mxu0 0.0
  %315 = vmatprep.mubr.f32.mxu0 0.0
  %316 = vmatmul.mubr.f32.gmra.mrb[0].mxu0 %v226
  %v317 = vpop.f32.mrb[0].mxu0
  %v318 = vadd.f32 %v249, %v317
  %v319 = vpop.f32.mrb[0].mxu0
  %320 = vmatprep.mubr.f32.mxu0 0.0
  %321 = vmatmul.mubr.f32.gmra.mrb[0].mxu0 %v227
  %v322 = vpop.f32.mrb[0].mxu0
  %v323 = vadd.f32 %v249, %v322
  %v324 = vpop.f32.mrb[0].mxu0
  %325 = vdwg.mxu0
  %326 = vst [vmem:[%s7] sm:$0xff] %v318
  %327 = vst [vmem:[%s7 + $0x8] sm:$0xff] %v323
  // Predicated region
  $region30: #{mlp_pallas.1} parent=0 // pred_check
    _
  $region31: #{mlp_pallas.1} parent=0 // pred_check_branch
    %329 = sbr.rel (0) target = $region33
  $region32: #{mlp_pallas.1} parent=0 // pred_region
    _
  $region33: #{mlp_pallas.1} parent=0 // pred_fallthru
    _
  // Predicated region
  $region34: #{mlp_pallas.1} parent=0 // pred_check
    _
  $region35: #{mlp_pallas.1} parent=0 // pred_check_branch
    %331 = sbr.rel (0) target = $region37
  $region36: #{mlp_pallas.1} parent=0 // pred_region
    _
  $region37: #{mlp_pallas.1} parent=0 // pred_fallthru
    _

</llo_original>
